<compile_context>
chip_gen: v7x
topology: tpu7x:2x2x1
jax: 0.10.0
libtpu: 0.0.40
codegen_flags: <defaults>
</compile_context>

<pallas_src>
import functools

import numpy as np
import jax
import jax.numpy as jnp
from jax import lax
from jax.experimental import pallas as pl
from jax.experimental.pallas import tpu as pltpu


def _contrastive_kernel(b_ref, ycol_ref, yrow_ref, out_ref, *, inv_temp, block_q):
    """One query-row block: per-row off-diagonal softmax cross-entropy."""
    qi = pl.program_id(0)
    n = b_ref.shape[0]
    r0 = pl.multiple_of(qi * block_q, block_q)

    bq = b_ref[pl.ds(r0, block_q), :]                     # (tq, bits)
    yq = ycol_ref[pl.ds(r0, block_q), :]                  # (tq, 1)

    # logits block (tq, N): default-precision MXU matmul, f32 accumulation.
    s = lax.dot_general(bq, b_ref[...], (((1,), (1,)), ((), ())),
                        preferred_element_type=jnp.float32) * inv_temp

    col = lax.broadcasted_iota(jnp.int32, (block_q, n), 1)
    row = r0 + lax.broadcasted_iota(jnp.int32, (block_q, n), 0)
    diag = row == col

    # Off-diagonal affinity with the diagonal pushed below 0/1 values; the
    # first-occurrence argmax over it equals torch's argmax on the compacted
    # (N, N-1) affinity rows (order-preserving compaction).
    aff_m = jnp.where(diag, -1.0, (yq == yrow_ref[...]).astype(jnp.float32))
    tmax = jnp.max(aff_m, axis=-1, keepdims=True)
    target = jnp.min(jnp.where(aff_m == tmax, col, n), axis=-1, keepdims=True)

    # Drop the diagonal from the logits and do one max / one exp pass.
    masked = jnp.where(diag, jnp.float32(-1e30), s)
    mrow = jnp.max(masked, axis=-1, keepdims=True)
    lse = mrow + jnp.log(jnp.sum(jnp.exp(masked - mrow), axis=-1, keepdims=True))
    tgt = jnp.sum(jnp.where(col == target, masked, 0.0), axis=-1, keepdims=True)

    out_ref[...] = lse - tgt                              # per-row CE, (tq, 1)


def _pick_block(n, block_q):
    """Largest row-block <= block_q that divides n and is sublane-aligned."""
    cap = min(block_q, n)
    for d in range(cap, 0, -1):
        if n % d == 0 and (d % 8 == 0 or d == n):
            return d
    return n


def contrastive_forward(b, y, *, temperature, block_q=128):
    b = b.astype(jnp.float32)
    N, bits = b.shape
    tq = _pick_block(N, block_q)
    grid = (N // tq,)

    ycol = y.reshape(N, 1).astype(jnp.int32)
    yrow = y.reshape(1, N).astype(jnp.int32)

    losses = pl.pallas_call(
        functools.partial(_contrastive_kernel,
                          inv_temp=1.0 / float(temperature), block_q=tq),
        grid=grid,
        out_shape=jax.ShapeDtypeStruct((N, 1), jnp.float32),
        in_specs=[
            pl.BlockSpec((N, bits), lambda i: (0, 0)),    # b: resident, DMA once
            pl.BlockSpec((N, 1), lambda i: (0, 0)),       # y as column, resident
            pl.BlockSpec((1, N), lambda i: (0, 0)),       # y as row, resident
        ],
        out_specs=pl.BlockSpec((tq, 1), lambda i: (i, 0)),
        compiler_params=pltpu.CompilerParams(
            dimension_semantics=("parallel",)),           # v7x: split qi over cores
    )(b, ycol, yrow)

    loss = jnp.mean(losses)
    return loss, {}


# ---------------------------------------------------------------------------
# Pure NumPy reference mirroring the torch forward.
# ---------------------------------------------------------------------------
def _reference(b, y, temperature):
    b = np.asarray(b, np.float64)
    y = np.asarray(y)
    N = len(b)
    logits = b @ b.T / temperature
    aff = (y[:, None] == y[None, :]).astype(np.float64)
    mask = ~np.eye(N, dtype=bool)
    sim = logits[mask].reshape(N, N - 1)
    affm = aff[mask].reshape(N, N - 1)
    t = affm.argmax(-1)
    mx = sim.max(-1, keepdims=True)
    lse = mx[:, 0] + np.log(np.exp(sim - mx).sum(-1))
    return float(np.mean(lse - sim[np.arange(N), t]))


if __name__ == "__main__":
    N, bits = 16, 32
    temperature = 0.2

    key = jax.random.PRNGKey(0)
    kb, ky = jax.random.split(key)
    b = jax.random.normal(kb, (N, bits), jnp.float32)
    b = b / jnp.linalg.norm(b, axis=-1, keepdims=True)    # unit-norm hash codes
    y = jax.random.randint(ky, (N,), 0, 4, jnp.int32)

    # block_q=8 -> grid of 2 row blocks, exercises the tiled path.
    loss, aux = contrastive_forward(b, y, temperature=temperature, block_q=8)
    loss = jax.block_until_ready(loss)

    ref = _reference(np.asarray(b), np.asarray(y), temperature)
    assert np.isfinite(float(loss))
    assert aux == {}
    np.testing.assert_allclose(float(loss), ref, rtol=5e-2, atol=5e-2)
    print("KERNEL_OK")
</pallas_src>

<mosaic_0001>
module attributes {stable_mosaic.version = 11 : i64} {
  func.func @_contrastive_kernel(%arg0: i32, %arg1: memref<16x32xf32, #tpu.memory_space<vmem>>, %arg2: memref<16x1xi32, #tpu.memory_space<vmem>>, %arg3: memref<1x16xi32, #tpu.memory_space<vmem>>, %arg4: memref<8x1xf32, #tpu.memory_space<vmem>>) attributes {dimension_semantics = [#tpu.dimension_semantics<parallel>], iteration_bounds = array<i64: 2>, scalar_prefetch = 0 : i64, scratch_operands = 0 : i64, tpu.core_type = #tpu.core_type<tc>, window_params = [{pipeline_mode = #tpu.pipeline_mode<synchronous>, transform_indices = @transform_0, window_bounds = array<i64: 16, 32>}, {pipeline_mode = #tpu.pipeline_mode<synchronous>, transform_indices = @transform_1, window_bounds = array<i64: 16, 1>}, {pipeline_mode = #tpu.pipeline_mode<synchronous>, transform_indices = @transform_2, window_bounds = array<i64: 1, 16>}, {transform_indices = @transform_3, window_bounds = array<i64: 8, 1>}]} {
    %c8_i32 = arith.constant 8 : i32
    %0 = arith.muli %arg0, %c8_i32 : i32
    %1 = tpu.assume_multiple %0, 8 : i32
    %2 = arith.index_cast %1 : i32 to index
    %c0 = arith.constant 0 : index
    %3 = vector.load %arg1[%2, %c0] : memref<16x32xf32, #tpu.memory_space<vmem>>, vector<8x32xf32>
    %4 = arith.index_cast %1 : i32 to index
    %c0_0 = arith.constant 0 : index
    %5 = vector.load %arg2[%4, %c0_0] : memref<16x1xi32, #tpu.memory_space<vmem>>, vector<8x1xi32>
    %c0_1 = arith.constant 0 : index
    %c0_2 = arith.constant 0 : index
    %6 = vector.load %arg1[%c0_1, %c0_2] : memref<16x32xf32, #tpu.memory_space<vmem>>, vector<16x32xf32>
    %cst = arith.constant dense<0.000000e+00> : vector<8x16xf32>
    %7 = tpu.matmul %3, %6, %cst {dimension_numbers = #tpu.dot_dimension_numbers<[1], [1], [0], [0], [0, 0, 1, 0], [], []>} : vector<8x32xf32>, vector<16x32xf32>, vector<8x16xf32> -> vector<8x16xf32>
    %cst_3 = arith.constant 5.000000e+00 : f32
    %8 = vector.broadcast %cst_3 : f32 to vector<8x16xf32>
    %9 = arith.mulf %7, %8 : vector<8x16xf32>
    %10 = tpu.iota {dimensions = array<i32: 1>} : vector<8x16xi32>
    %11 = tpu.iota {dimensions = array<i32: 0>} : vector<8x16xi32>
    %12 = vector.broadcast %1 : i32 to vector<8x16xi32>
    %13 = arith.addi %12, %11 : vector<8x16xi32>
    %14 = arith.cmpi eq, %13, %10 : vector<8x16xi32>
    %c0_4 = arith.constant 0 : index
    %c0_5 = arith.constant 0 : index
    %15 = vector.load %arg3[%c0_4, %c0_5] : memref<1x16xi32, #tpu.memory_space<vmem>>, vector<1x16xi32>
    %16 = vector.broadcast %5 : vector<8x1xi32> to vector<8x16xi32>
    %17 = vector.broadcast %15 : vector<1x16xi32> to vector<8x16xi32>
    %18 = arith.cmpi eq, %16, %17 : vector<8x16xi32>
    %19 = arith.extui %18 : vector<8x16xi1> to vector<8x16xi32>
    %20 = arith.sitofp %19 : vector<8x16xi32> to vector<8x16xf32>
    %cst_6 = arith.constant -1.000000e+00 : f32
    %21 = vector.broadcast %cst_6 : f32 to vector<8x16xf32>
    %22 = arith.select %14, %21, %20 : vector<8x16xi1>, vector<8x16xf32>
    %cst_7 = arith.constant dense<0xFF800000> : vector<8xf32>
    %23 = vector.multi_reduction <maximumf>, %22, %cst_7 [1] : vector<8x16xf32> to vector<8xf32>
    %24 = vector.shape_cast %23 : vector<8xf32> to vector<8x1xf32>
    %25 = vector.broadcast %24 : vector<8x1xf32> to vector<8x16xf32>
    %26 = arith.cmpf oeq, %22, %25 : vector<8x16xf32>
    %c16_i32 = arith.constant 16 : i32
    %27 = vector.broadcast %c16_i32 : i32 to vector<8x16xi32>
    %28 = arith.select %26, %10, %27 : vector<8x16xi1>, vector<8x16xi32>
    %cst_8 = arith.constant dense<2147483647> : vector<8xi32>
    %29 = vector.multi_reduction <minsi>, %28, %cst_8 [1] : vector<8x16xi32> to vector<8xi32>
    %30 = vector.shape_cast %29 : vector<8xi32> to vector<8x1xi32>
    %cst_9 = arith.constant -1.000000e+30 : f32
    %31 = vector.broadcast %cst_9 : f32 to vector<8x16xf32>
    %32 = arith.select %14, %31, %9 : vector<8x16xi1>, vector<8x16xf32>
    %cst_10 = arith.constant dense<0xFF800000> : vector<8xf32>
    %33 = vector.multi_reduction <maximumf>, %32, %cst_10 [1] : vector<8x16xf32> to vector<8xf32>
    %34 = vector.shape_cast %33 : vector<8xf32> to vector<8x1xf32>
    %35 = vector.broadcast %34 : vector<8x1xf32> to vector<8x16xf32>
    %36 = arith.subf %32, %35 : vector<8x16xf32>
    %37 = math.exp %36 : vector<8x16xf32>
    %cst_11 = arith.constant dense<0.000000e+00> : vector<8xf32>
    %38 = vector.multi_reduction <add>, %37, %cst_11 [1] : vector<8x16xf32> to vector<8xf32>
    %39 = vector.shape_cast %38 : vector<8xf32> to vector<8x1xf32>
    %40 = math.log %39 : vector<8x1xf32>
    %41 = arith.addf %34, %40 : vector<8x1xf32>
    %42 = vector.broadcast %30 : vector<8x1xi32> to vector<8x16xi32>
    %43 = arith.cmpi eq, %10, %42 : vector<8x16xi32>
    %cst_12 = arith.constant 0.000000e+00 : f32
    %44 = vector.broadcast %cst_12 : f32 to vector<8x16xf32>
    %45 = arith.select %43, %32, %44 : vector<8x16xi1>, vector<8x16xf32>
    %cst_13 = arith.constant dense<0.000000e+00> : vector<8xf32>
    %46 = vector.multi_reduction <add>, %45, %cst_13 [1] : vector<8x16xf32> to vector<8xf32>
    %47 = vector.shape_cast %46 : vector<8xf32> to vector<8x1xf32>
    %48 = arith.subf %41, %47 : vector<8x1xf32>
    %c0_14 = arith.constant 0 : index
    %c0_15 = arith.constant 0 : index
    %49 = vector.load %arg4[%c0_14, %c0_15] : memref<8x1xf32, #tpu.memory_space<vmem>>, vector<8x1xf32>
    tpu.vector_store %arg4[%c0_14, %c0_15], %48 {strides = array<i32>} : memref<8x1xf32, #tpu.memory_space<vmem>>, vector<8x1xf32>,
    return
  }
  func.func @transform_0(%arg0: i32) -> (i32, i32) {
    %c0_i32 = arith.constant 0 : i32
    %c0_i32_0 = arith.constant 0 : i32
    %c0_i32_1 = arith.constant 0 : i32
    return %c0_i32, %c0_i32_0 : i32, i32
  }
  func.func @transform_1(%arg0: i32) -> (i32, i32) {
    %c0_i32 = arith.constant 0 : i32
    %c0_i32_0 = arith.constant 0 : i32
    %c0_i32_1 = arith.constant 0 : i32
    return %c0_i32, %c0_i32_0 : i32, i32
  }
  func.func @transform_2(%arg0: i32) -> (i32, i32) {
    %c0_i32 = arith.constant 0 : i32
    %c0_i32_0 = arith.constant 0 : i32
    %c0_i32_1 = arith.constant 0 : i32
    return %c0_i32, %c0_i32_0 : i32, i32
  }
  func.func @transform_3(%arg0: i32) -> (i32, i32) {
    %c0_i32 = arith.constant 0 : i32
    %c0_i32_0 = arith.constant 0 : i32
    return %arg0, %c0_i32 : i32, i32
  }
}

</mosaic_0001>

<llo_original>
// kernel: tpu_custom_call.1
$region0: #{tpu_custom_call.1}
  #allocation0 [shape = 'u32[]', space=smem, size = 0x4, offset = 0x4, fixed_abs, tag = 'smem constant byte address 0x4 - core index']
  #allocation1 [shape = 'u32[144,128]{1,0:T(1,128)}', space=vmem, size = 0x12000, scoped, tag = 'internal scratch']
  %s0 = inlined_call_operand.vmem [shape: f32[16,32], index: 0, kind: input, shape index: {}]
  %s1 = inlined_call_operand.vmem [shape: s32[16,1], index: 1, kind: input, shape index: {}]
  %s2 = inlined_call_operand.vmem [shape: s32[1,16], index: 2, kind: input, shape index: {}]
  %s3 = inlined_call_operand.vmem [shape: f32[16,1], index: 3, kind: output, shape index: {}]
  %s4 = sld [smem:[#allocation0]]
  $region45: #{tpu_custom_call.1} parent=0
    _
  %s6 = ssub.s32 1, %s4
  %s7 = scalar_select 0, %s6, %s4
  loop: start=0, step=1, limit=4
  $region2: #{tpu_custom_call.1} parent=0 // loop_pre_header
    _
  $region3: #{tpu_custom_call.1} parent=0 // loop_header
    %s9 = sphi 0, %s13
    %p10 = scmp.ge.s32.totalorder %s9, 4
    %s17 = sphi 0, %s17
    %s19 = sphi 0, %s17
    %s20 = sphi 0, %s19
    %s34 = sphi 0, %s20
    %s38 = sphi 0, %s38
    %s40 = sphi 0, %s38
    %s41 = sphi 0, %s40
    %s55 = sphi 0, %s41
    %s59 = sphi 0, %s59
    %s61 = sphi 0, %s59
    %s62 = sphi 0, %s61
    %s76 = sphi 0, %s62
    %s82 = sphi 0, %s84
    %s85 = sphi 0, %s82
    %s86 = sphi 0, %s85
    %s102 = sphi 0, %s86
  $region4: #{tpu_custom_call.1} parent=0 // loop_header_branch
    %12 = sbr.rel (%p10) target = $region8
  $region5: #{tpu_custom_call.1} parent=0 // loop_body
    %s14 = ssub.s32 %s9, 1
    %s15 = ssub.s32 %s9, 2
    %s16 = sadd.s32 %s9, 1
    %s18 = sadd.s32 %s17, 1
    %p21 = scmp.eq.s32.totalorder %s9, 1
    %p22 = scmp.ne.s32.totalorder %s17, %s19
    %p23 = scmp.eq.s32.totalorder %s9, 0
    %p24 = por %p22, %p23
    %p25 = scmp.ne.s32.totalorder %s17, %s19
    %p26 = scmp.eq.s32.totalorder %s14, 1
    %p27 = por %p25, %p26
    %p28 = scmp.ne.s32.totalorder %s19, %s20
    %p29 = scmp.eq.s32.totalorder %s14, 0
    %p30 = por %p28, %p29
    %p31 = scmp.ne.s32.totalorder %s19, %s20
    %p32 = scmp.eq.s32.totalorder %s15, 1
    %p33 = por %p31, %p32
    %p35 = scmp.ne.s32.totalorder %s20, %s34
    %p36 = scmp.eq.s32.totalorder %s15, 0
    %p37 = por %p35, %p36
    %s39 = sadd.s32 %s38, 1
    %p42 = scmp.eq.s32.totalorder %s9, 1
    %p43 = scmp.ne.s32.totalorder %s38, %s40
    %p44 = scmp.eq.s32.totalorder %s9, 0
    %p45 = por %p43, %p44
    %p46 = scmp.ne.s32.totalorder %s38, %s40
    %p47 = scmp.eq.s32.totalorder %s14, 1
    %p48 = por %p46, %p47
    %p49 = scmp.ne.s32.totalorder %s40, %s41
    %p50 = scmp.eq.s32.totalorder %s14, 0
    %p51 = por %p49, %p50
    %p52 = scmp.ne.s32.totalorder %s40, %s41
    %p53 = scmp.eq.s32.totalorder %s15, 1
    %p54 = por %p52, %p53
    %p56 = scmp.ne.s32.totalorder %s41, %s55
    %p57 = scmp.eq.s32.totalorder %s15, 0
    %p58 = por %p56, %p57
    %s60 = sadd.s32 %s59, 1
    %p63 = scmp.eq.s32.totalorder %s9, 1
    %p64 = scmp.ne.s32.totalorder %s59, %s61
    %p65 = scmp.eq.s32.totalorder %s9, 0
    %p66 = por %p64, %p65
    %p67 = scmp.ne.s32.totalorder %s59, %s61
    %p68 = scmp.eq.s32.totalorder %s14, 1
    %p69 = por %p67, %p68
    %p70 = scmp.ne.s32.totalorder %s61, %s62
    %p71 = scmp.eq.s32.totalorder %s14, 0
    %p72 = por %p70, %p71
    %p73 = scmp.ne.s32.totalorder %s61, %s62
    %p74 = scmp.eq.s32.totalorder %s15, 1
    %p75 = por %p73, %p74
    %p77 = scmp.ne.s32.totalorder %s62, %s76
    %p78 = scmp.eq.s32.totalorder %s15, 0
    %p79 = por %p77, %p78
    %s80 = ssub.s32 %s9, %s16
    %p81 = scmp.eq.s32.totalorder %s80, 0
    %s83 = sadd.s32 %s82, 1
    %s84 = scalar_select %p81, %s82, %s83
    %p87 = pneg %p81
    %p88 = scmp.eq.s32.totalorder %s9, 1
    %p89 = por %p87, %p88
    %p90 = scmp.ne.s32.totalorder %s82, %s85
    %p91 = scmp.eq.s32.totalorder %s9, 0
    %p92 = por %p90, %p91
    %p93 = scmp.ne.s32.totalorder %s82, %s85
    %p94 = scmp.eq.s32.totalorder %s14, 1
    %p95 = por %p93, %p94
    %p96 = scmp.ne.s32.totalorder %s85, %s86
    %p97 = scmp.eq.s32.totalorder %s14, 0
    %p98 = por %p96, %p97
    %p99 = scmp.ne.s32.totalorder %s85, %s86
    %p100 = scmp.eq.s32.totalorder %s15, 1
    %p101 = por %p99, %p100
    %p103 = scmp.ne.s32.totalorder %s86, %s102
    %p104 = scmp.eq.s32.totalorder %s15, 0
    %p105 = por %p103, %p104
    %p106 = scmp.le.s32.totalorder 1, %s9
    %p107 = scmp.lt.s32.totalorder %s9, 3
    %p108 = pnand %p106, %p107
    %p109 = pneg %p108
    // Predicated region
    $region9: #{tpu_custom_call.1} parent=5 // pred_check
      _
    $region10: #{tpu_custom_call.1} parent=5 // pred_check_branch
      %111 = sbr.rel (%p108) target = $region12
    $region11: #{tpu_custom_call.1} parent=5 // pred_region
      %s112 = ssub.s32 %s9, 1
      // Predicated region
      $region13: #{tpu_custom_call.1} parent=11 // pred_check
        %p113 = pneg %p30
      $region14: #{tpu_custom_call.1} parent=11 // pred_check_branch
        %115 = sbr.rel (%p113) target = $region16
      $region15: #{tpu_custom_call.1} parent=11 // pred_region
        _
      $region16: #{tpu_custom_call.1} parent=11 // pred_fallthru
        _
      // Predicated region
      $region17: #{tpu_custom_call.1} parent=11 // pred_check
        %p116 = pneg %p51
      $region18: #{tpu_custom_call.1} parent=11 // pred_check_branch
        %118 = sbr.rel (%p116) target = $region20
      $region19: #{tpu_custom_call.1} parent=11 // pred_region
        _
      $region20: #{tpu_custom_call.1} parent=11 // pred_fallthru
        _
      // Predicated region
      $region21: #{tpu_custom_call.1} parent=11 // pred_check
        %p119 = pneg %p72
      $region22: #{tpu_custom_call.1} parent=11 // pred_check_branch
        %121 = sbr.rel (%p119) target = $region24
      $region23: #{tpu_custom_call.1} parent=11 // pred_region
        _
      $region24: #{tpu_custom_call.1} parent=11 // pred_fallthru
        _
    $region12: #{tpu_custom_call.1} parent=5 // pred_fallthru
      _
    %p122 = scmp.lt.s32.totalorder %s9, 2
    // Predicated region
    $region25: #{tpu_custom_call.1} parent=5 // pred_check
      %p123 = pneg %p122
    $region26: #{tpu_custom_call.1} parent=5 // pred_check_branch
      %125 = sbr.rel (%p123) target = $region28
    $region27: #{tpu_custom_call.1} parent=5 // pred_region
      _
    $region28: #{tpu_custom_call.1} parent=5 // pred_fallthru
      _
    %p126 = scmp.le.s32.totalorder 1, %s9
    %p127 = scmp.lt.s32.totalorder %s9, 3
    %p128 = pnand %p126, %p127
    %p129 = pneg %p128
    // Predicated region
    $region29: #{tpu_custom_call.1} parent=5 // pred_check
      _
    $region30: #{tpu_custom_call.1} parent=5 // pred_check_branch
      %131 = sbr.rel (%p128) target = $region32
    $region31: #{tpu_custom_call.1} parent=5 // pred_region
      %s132 = ssub.s32 %s9, 1
      %p133 = pneg %p30
      %p134 = pneg %p27
      %p135 = pneg %p51
      %p136 = pneg %p48
      %p137 = pneg %p72
      %p138 = pneg %p69
      %p139 = pneg %p98
      %p140 = pneg %p95
      %p141 = scmp.lt.s32.totalorder %s14, 1
      %s142 = scalar_select %p141, %s14, 1
      %s143 = smul.addr %s142, 8
      %s144 = scalar_lea.vmem %s3, %s143
      %p145 = scmp.lt.s32.totalorder %s14, 1
      %s146 = scalar_select %p145, %s14, 1
      %s147 = smul.addr %s146, 8
      %s148 = scalar_lea.vmem %s3, %s147
      %s149 = smul.u32 %s14, 8
      %s150 = scalar_lea.vmem %s0, %s149
      %v151 = vld [vmem:[%s150] sm:$0xff]
      %s152 = scalar_lea.vmem %s1, %s149
      %v153 = vld [vmem:[%s152] sm:$0xff]
      %v154 = vld [vmem:[%s0] sm:$0xff]
      %v155 = vld [vmem:[%s0 + $0x8] sm:$0xff]
      %vm156 = vcmask 261120
      %v158 = vsel %vm156, %v151, 0
      %v161 = vsel %vm156, %v154, 0
      %v164 = vsel %vm156, %v155, 0
      %166 = vmatprep.subr.mxu0 0.0
      %167 = vmatpush1.xpose.msra.mxu0 %v161
      %168 = vmatprep.subr.mxu0 0.0
      %169 = vmatpush1.xpose.msra.mxu0 %v164
      %170 = vmatprep.subr.mxu0 0.0
      %171 = vmatpush1.xpose.msra.mxu0 0.0
      %172 = vmatprep.subr.mxu0 0.0
      %173 = vmatpush1.xpose.msra.mxu0 0.0
      %174 = vmatprep.subr.mxu0 0.0
      %175 = vmatpush1.xpose.msra.mxu0 0.0
      %176 = vmatprep.subr.mxu0 0.0
      %177 = vmatpush1.xpose.msra.mxu0 0.0
      %178 = vmatprep.subr.mxu0 0.0
      %179 = vmatpush1.xpose.msra.mxu0 0.0
      %180 = vmatprep.subr.mxu0 0.0
      %181 = vmatpush1.xpose.msra.mxu0 0.0
      %182 = vmatprep.subr.mxu0 0.0
      %183 = vmatpush1.xpose.msra.mxu0 0.0
      %184 = vmatprep.subr.mxu0 0.0
      %185 = vmatpush1.xpose.msra.mxu0 0.0
      %186 = vmatprep.subr.mxu0 0.0
      %187 = vmatpush1.xpose.msra.mxu0 0.0
      %188 = vmatprep.subr.mxu0 0.0
      %189 = vmatpush1.xpose.msra.mxu0 0.0
      %190 = vmatprep.subr.mxu0 0.0
      %191 = vmatpush1.xpose.msra.mxu0 0.0
      %192 = vmatprep.subr.mxu0 0.0
      %193 = vmatpush1.xpose.msra.mxu0 0.0
      %194 = vmatprep.subr.mxu0 0.0
      %195 = vmatpush1.xpose.msra.mxu0 0.0
      %196 = vmatprep.subr.mxu0 0.0
      %197 = vmatpush1.xpose.msra.mxu0 0.0
      %198 = vmatprep.subr.mxu0 0.0
      %199 = vmatpush1.xpose.msra.mxu0 0.0
      %200 = vmatprep.subr.mxu0 0.0
      %201 = vmatpush1.xpose.msra.mxu0 0.0
      %202 = vmatprep.subr.mxu0 0.0
      %203 = vmatpush1.xpose.msra.mxu0 0.0
      %204 = vmatprep.subr.mxu0 0.0
      %205 = vmatpush1.xpose.msra.mxu0 0.0
      %206 = vmatprep.subr.mxu0 0.0
      %207 = vmatpush1.xpose.msra.mxu0 0.0
      %208 = vmatprep.subr.mxu0 0.0
      %209 = vmatpush1.xpose.msra.mxu0 0.0
      %210 = vmatprep.subr.mxu0 0.0
      %211 = vmatpush1.xpose.msra.mxu0 0.0
      %212 = vmatprep.subr.mxu0 0.0
      %213 = vmatpush1.xpose.msra.mxu0 0.0
      %214 = vmatprep.subr.mxu0 0.0
      %215 = vmatpush1.xpose.msra.mxu0 0.0
      %216 = vmatprep.subr.mxu0 0.0
      %217 = vmatpush1.xpose.msra.mxu0 0.0
      %218 = vmatprep.subr.mxu0 0.0
      %219 = vmatpush1.xpose.msra.mxu0 0.0
      %220 = vmatprep.subr.mxu0 0.0
      %221 = vmatpush1.xpose.msra.mxu0 0.0
      %222 = vmatprep.subr.mxu0 0.0
      %223 = vmatpush1.xpose.msra.mxu0 0.0
      %224 = vmatprep.subr.mxu0 0.0
      %225 = vmatpush1.xpose.msra.mxu0 0.0
      %226 = vmatprep.subr.mxu0 0.0
      %227 = vmatpush1.xpose.msra.mxu0 0.0
      %228 = vmatprep.subr.mxu0 0.0
      %229 = vmatpush1.xpose.msra.mxu0 0.0
      %230 = vmatprep.mubr.f32.mxu0 0.0
      %231 = vmatmul.mubr.f32.gmra.mrb[0].mxu0 %v158
      %v232 = vpop.f32.mrb[0].mxu0
      %v233 = vadd.f32 0.0, %v232
      %v234 = vpop.f32.mrb[0].mxu0
      %235 = vdwg.mxu0
      %v236 = vmul.f32 %v233, 5.0
      %v237 = vlaneseq
      %v238 = vand.u32 %v237, 127
      %v239 = vlaneseq
      %v240 = vshrl.u32 %v239, 7
      %v241 = vstv %s149
      %v242 = vadd.s32 %v241, %v240
      %vm243 = vcmp.eq.s32.totalorder %v242, %v238
      %v244 = vld [vmem:[%s2] sm:$0x1]
      %245 = vset.pattern.permute.xlu0 0
      %246 = vperm.xlu0 %245, %v153
      %v247 = vpop.permute.xlu0 %246
      %v248 = vlaneseq
      %v249 = vshrl.u32 %v248, 7
      %v250 = vsub.s32 0, %v249
      %v251 = vrot.slane %v244, %v250
      %vm252 = vcmp.eq.s32.totalorder %v247, %v251
      %v253 = vsel %vm252, 1, 0
      %v254 = vcvt.s32.f32 %v253
      %v255 = vsel %vm243, -1.0, %v254
      %vm256 = vcmask 130048
      %v257 = vsel %vm256, %v255, -inf
      %258 = vmax.xlane.f32.xlu0 %v257
      %v259 = vpop.xlane.xlu0 %258
      %vm260 = vcmp.eq.f32.partialorder %v255, %v259
      %v261 = vsel %vm260, %v238, 16
      %v262 = vsel %vm256, %v261, 2147483647
      %v263 = vand.u32 %v262, 65535
      %v264 = vshra.s32 %v262, 16
      %v265 = vcvt.s32.f32 %v263
      %v266 = vcvt.s32.f32 %v264
      %267 = vmin.xlane.f32.xlu0 %v266
      %v268 = vpop.xlane.xlu0 %267
      %vm269 = vcmp.eq.f32.partialorder %v266, %v268
      %v270 = vsel %vm269, %v265, inf
      %271 = vmin.xlane.f32.xlu0 %v270
      %v272 = vpop.xlane.xlu0 %271
      %v273 = vcvt.f32.s32 %v272
      %v274 = vcvt.f32.s32 %v268
      %v275 = vshll.u32 %v274, 16
      %v276 = vadd.s32 %v275, %v273
      %v277 = vsel %vm243, -1e+30, %v236
      %v278 = vsel %vm256, %v277, -inf
      %279 = vmax.xlane.f32.xlu0 %v278
      %v280 = vpop.xlane.xlu0 %279
      %v281 = vsub.f32 %v277, %v280
      %v282 = vmul.f32 %v281, 1.442695
      %v283 = vpow.pop %v282
      %v284 = vsel %vm256, %v283, 0.0
      %285 = vadd.xlane.f32.xlu0 %v284
      %v286 = vpop.xlane.xlu0 %285
      %v287 = vlog2.pop %v286
      %v288 = vmul.f32 %v287, 0.6931472
      %v289 = vadd.f32 %v280, %v288
      %vm290 = vcmp.eq.s32.totalorder %v238, %v276
      %v291 = vsel %vm290, %v277, 0.0
      %v292 = vsel %vm256, %v291, 0.0
      %293 = vadd.xlane.f32.xlu0 %v292
      %v294 = vpop.xlane.xlu0 %293
      %v295 = vsub.f32 %v289, %v294
      %vm296 = vcmask 7168
      %297 = vst.msk [vmem:[%s148] sm:$0xff] %vm296, %v295
      %p298 = scmp.lt.s32.totalorder %s14, 1
      %s299 = scalar_select %p298, %s14, 1
      %s300 = smul.addr %s299, 8
      %s301 = scalar_lea.vmem %s3, %s300
      // Predicated region
      $region33: #{tpu_custom_call.1} parent=31 // pred_check
        %p302 = pneg %p95
      $region34: #{tpu_custom_call.1} parent=31 // pred_check_branch
        %304 = sbr.rel (%p302) target = $region36
      $region35: #{tpu_custom_call.1} parent=31 // pred_region
        _
      $region36: #{tpu_custom_call.1} parent=31 // pred_fallthru
        _
    $region32: #{tpu_custom_call.1} parent=5 // pred_fallthru
      _
    %p305 = scmp.le.s32.totalorder 2, %s9
    // Predicated region
    $region37: #{tpu_custom_call.1} parent=5 // pred_check
      %p306 = pneg %p305
    $region38: #{tpu_custom_call.1} parent=5 // pred_check_branch
      %308 = sbr.rel (%p306) target = $region40
    $region39: #{tpu_custom_call.1} parent=5 // pred_region
      %s309 = ssub.s32 %s9, 2
      // Predicated region
      $region41: #{tpu_custom_call.1} parent=39 // pred_check
        %p310 = pneg %p101
      $region42: #{tpu_custom_call.1} parent=39 // pred_check_branch
        %312 = sbr.rel (%p310) target = $region44
      $region43: #{tpu_custom_call.1} parent=39 // pred_region
        %p313 = scmp.lt.s32.totalorder %s15, 1
        %s314 = scalar_select %p313, %s15, 1
        %s315 = smul.addr %s314, 8
        %s316 = scalar_lea.vmem %s3, %s315
      $region44: #{tpu_custom_call.1} parent=39 // pred_fallthru
        _
    $region40: #{tpu_custom_call.1} parent=5 // pred_fallthru
      _
  $region6: #{tpu_custom_call.1} parent=0 // loop_footer
    %s13 = sadd.s32 1, %s9
  $region7: #{tpu_custom_call.1} parent=0 // loop_footer_branch
    %8 = sbr.rel target = $region3
  $region8: #{tpu_custom_call.1} parent=0 // loop_exit
    _

</llo_original>
